<compile_context>
chip_gen: v5e
topology: v5e:2x2
jax: 0.10.0
libtpu: 0.0.40
codegen_flags: <defaults>
</compile_context>

<pallas_src>
import jax
import jax.numpy as jnp
from jax.experimental import pallas as pl
from jax.experimental.pallas import tpu as pltpu


def _round_up(x, m):
    return (x + m - 1) // m * m


def _vmem_capacity_bytes():
    try:
        cap = getattr(pltpu.get_tpu_info(), "vmem_capacity_bytes", None)
        if cap:
            return int(cap)
    except Exception:
        pass
    return 64 * 1024 * 1024      # conservative (v7x per-core VMEM)


def _pick_fold(rows_hm, rows_rg, hw):
    """Spatial->sublane fold f in {1,2,4,8} maximizing sublane fill while
    keeping the folded spatial width >= 128 lanes (ties -> smaller fold)."""
    best_f, best_score = 1, -1.0
    f = 1
    while f <= 8:
        if f == 1 or pl.cdiv(hw, f) >= 128:
            fill_h = (rows_hm * f) / _round_up(rows_hm * f, 8)
            fill_r = (rows_rg * f) / _round_up(rows_rg * f, 8)
            score = 0.8 * fill_h + 0.2 * fill_r      # heatmap math dominates
            if score > best_score + 1e-9:
                best_f, best_score = f, score
        f *= 2
    return best_f


def _folded_rows(r):
    return 8 if r % 8 == 0 else r


def _fold_tile(x, n_lane_chunks):
    """(R, T) -> (R', 128) partial sums using only 128-lane / 8-sublane
    aligned static slices + VPU adds (no XLU reductions, no scalar crossing).
    R' = 8 if R % 8 == 0 else R."""
    acc = x[:, 0:128]
    for k in range(1, n_lane_chunks):
        acc = acc + x[:, k * 128:(k + 1) * 128]
    r = acc.shape[0]
    if r > 8 and r % 8 == 0:
        s = acc[0:8, :]
        for k in range(1, r // 8):
            s = s + acc[k * 8:(k + 1) * 8, :]
        acc = s
    return acc


def _make_kernel(batch, n_cls, n_reg, fold, n_lane_chunks):
    """Kernel over one [*, tile] slab of the folded spatial axis."""

    def kernel(ph_ref, pr_ref, th_ref, tr_ref, out_ref,
               acc_np, acc_pl, acc_nl, acc_th, acc_pr):
        i = pl.program_id(1)                     # spatial ("arbitrary") axis

        @pl.when(i == 0)
        def _init():
            acc_np[...] = jnp.zeros_like(acc_np)
            acc_pl[...] = jnp.zeros_like(acc_pl)
            acc_nl[...] = jnp.zeros_like(acc_nl)
            acc_th[...] = jnp.zeros_like(acc_th)
            acc_pr[...] = jnp.zeros_like(acc_pr)

        x = ph_ref[...].astype(jnp.float32)      # (B*C*f, T) heatmap logits
        th = th_ref[...].astype(jnp.float32)     # (B*C*f, T) target in [0,1]
        adr = jnp.abs(pr_ref[...].astype(jnp.float32) -
                      tr_ref[...].astype(jnp.float32))   # (B*2*f, T)

        # ---- focal-loss pieces via stable log-sigmoid identities ----
        e = jnp.exp(-jnp.abs(x))                 # exp(-|x|) in (0, 1]
        log1pe = jnp.log(1.0 + e)                # argument in [1,2] -> accurate
        log_pred = -(jnp.maximum(-x, 0.0) + log1pe)     # log(sigmoid(x))
        log_npred = -(jnp.maximum(x, 0.0) + log1pe)     # log(1 - sigmoid(x))
        d = 1.0 + e
        r = pl.reciprocal(d, approx=True)
        r = r * (2.0 - d * r)                    # one Newton step (~1e-7 rel)
        er = e * r
        nonneg = x >= 0.0
        pred = jnp.where(nonneg, r, er)          # sigmoid(x)
        npred = jnp.where(nonneg, er, r)         # 1 - sigmoid(x)

        pos_inds = (th == 1.0).astype(jnp.float32)
        neg_inds = 1.0 - pos_inds                # th in [0,1]; padded lanes
                                                 # give pred^3 == 0 anyway
        omt = 1.0 - th
        omt2 = omt * omt
        neg_w = omt2 * omt2                      # (1 - gt)^4
        pred3 = pred * pred * pred
        npred3 = npred * npred * npred
        pos_loss = log_pred * npred3 * pos_inds
        neg_loss = log_npred * pred3 * neg_w * neg_inds

        acc_np[...] += _fold_tile(pos_inds, n_lane_chunks)
        acc_pl[...] += _fold_tile(pos_loss, n_lane_chunks)
        acc_nl[...] += _fold_tile(neg_loss, n_lane_chunks)
        acc_th[...] += _fold_tile(th, n_lane_chunks)

        # ---- regression pairing: per batch, (sum_c th) * (sum_j |dr|) ----
        for bb in range(batch):
            hb = bb * n_cls * fold
            th_b = th[hb:hb + fold, :]
            for cc in range(1, n_cls):
                th_b = th_b + th[hb + cc * fold:hb + (cc + 1) * fold, :]
            rb = bb * n_reg * fold
            adr_b = adr[rb:rb + fold, :]
            for jj in range(1, n_reg):
                adr_b = adr_b + adr[rb + jj * fold:rb + (jj + 1) * fold, :]
            acc_pr[...] += _fold_tile(th_b * adr_b, n_lane_chunks)

        @pl.when(i == pl.num_programs(1) - 1)
        def _done():
            # Only a cheap sublane reduce here; the 128-lane reduce and the
            # cross-core sum happen in plain JAX on the (splits, 5, 128) output.
            out_ref[0, 0:1, :] = jnp.sum(acc_np[...], axis=0, keepdims=True)
            out_ref[0, 1:2, :] = jnp.sum(acc_pl[...], axis=0, keepdims=True)
            out_ref[0, 2:3, :] = jnp.sum(acc_nl[...], axis=0, keepdims=True)
            out_ref[0, 3:4, :] = jnp.sum(acc_th[...], axis=0, keepdims=True)
            out_ref[0, 4:5, :] = jnp.sum(acc_pr[...], axis=0, keepdims=True)

    return kernel


def _centernet_sums(pred_heatmap, pred_regr, target_heatmap, target_regr,
                    *, tile=None, max_tile=32768, vmem_block_budget=None):
    """Returns f32[5] = (num_pos, pos_loss_sum, neg_loss_sum, th_sum, regr_num)."""
    b, c, h, w = pred_heatmap.shape
    rc = pred_regr.shape[1]                      # 2 regression channels
    hw = h * w

    # ---- sublane packing: fold part of the spatial axis into rows ----
    fold = _pick_fold(b * c, b * rc, hw)
    rows_h = b * c * fold
    rows_r = b * rc * fold
    hw_fold = pl.cdiv(hw, fold)

    cap = _vmem_capacity_bytes()
    budget = vmem_block_budget or max(8 << 20, min(24 << 20, cap // 3))

    def _isz(a):
        return jnp.dtype(a.dtype).itemsize

    # bytes per lane column of the double-buffered input blocks (sublane-padded)
    per_lane = 2 * (_round_up(rows_h, 8) * (_isz(pred_heatmap) + _isz(target_heatmap))
                    + _round_up(rows_r, 8) * (_isz(pred_regr) + _isz(target_regr)))

    if tile is None:
        budget_tile = max(128, (budget // per_lane) // 128 * 128)
        # ~>=4 tiles total so DMA/compute still overlap; budget caps huge inputs
        tile = min(budget_tile, max_tile, _round_up(pl.cdiv(hw_fold, 4), 128))
    tile = max(128, _round_up(int(tile), 128))

    n_total = pl.cdiv(hw_fold, tile)
    splits = 2 if n_total > 1 else 1             # 2-way parallel split (v7x megacore)
    n_per_core = pl.cdiv(n_total, splits)
    n_total = splits * n_per_core
    tile = _round_up(pl.cdiv(hw_fold, n_total), 128)   # shrink to cut padding
    w_pad = n_total * tile
    cols = fold * w_pad

    ph = pred_heatmap.reshape(b * c, hw)
    th = target_heatmap.reshape(b * c, hw)
    pr = pred_regr.reshape(b * rc, hw)
    tr = target_regr.reshape(b * rc, hw)
    if cols != hw:
        pad = ((0, 0), (0, cols - hw))
        # Heatmap logits padded with a large FINITE negative: sigmoid -> 0,
        # pred^3 flushes to 0, pos_inds = 0 -> padded lanes add exactly zero
        # to every sum (no per-step validity mask needed).
        ph = jnp.pad(ph, pad, constant_values=-40.0)
        th = jnp.pad(th, pad)
        pr = jnp.pad(pr, pad)
        tr = jnp.pad(tr, pad)
    ph = ph.reshape(rows_h, w_pad)
    th = th.reshape(rows_h, w_pad)
    pr = pr.reshape(rows_r, w_pad)
    tr = tr.reshape(rows_r, w_pad)

    blk_bytes = per_lane * tile
    vmem_limit = int(min(cap * 5 // 8, max(blk_bytes + (8 << 20), 16 << 20)))

    hm_spec = pl.BlockSpec((rows_h, tile), lambda p, i: (0, p * n_per_core + i))
    rg_spec = pl.BlockSpec((rows_r, tile), lambda p, i: (0, p * n_per_core + i))
    out_spec = pl.BlockSpec((1, 5, 128), lambda p, i: (p, 0, 0))

    n_hm = rows_h * w_pad
    n_rg = rows_r * w_pad
    cost = pl.CostEstimate(
        flops=int(36 * n_hm + 8 * n_rg),
        transcendentals=int(3 * n_hm),
        bytes_accessed=int(n_hm * (_isz(ph) + _isz(th))
                           + n_rg * (_isz(pr) + _isz(tr))
                           + splits * 5 * 128 * 4),
    )

    accr_h = _folded_rows(rows_h)
    kernel = _make_kernel(b, c, rc, fold, tile // 128)

    out = pl.pallas_call(
        kernel,
        out_shape=jax.ShapeDtypeStruct((splits, 5, 128), jnp.float32),
        grid=(splits, n_per_core),
        in_specs=[hm_spec, rg_spec, hm_spec, rg_spec],
        out_specs=out_spec,
        scratch_shapes=[
            pltpu.VMEM((accr_h, 128), jnp.float32),   # sum pos_inds
            pltpu.VMEM((accr_h, 128), jnp.float32),   # sum pos_loss
            pltpu.VMEM((accr_h, 128), jnp.float32),   # sum neg_loss
            pltpu.VMEM((accr_h, 128), jnp.float32),   # sum target heatmap
            pltpu.VMEM((fold, 128), jnp.float32),     # sum regr pairing
        ],
        compiler_params=pltpu.CompilerParams(
            dimension_semantics=("parallel", "arbitrary"),
            vmem_limit_bytes=vmem_limit,
        ),
        cost_estimate=cost,
    )(ph, pr, th, tr)

    # Final cross-lane + cross-core reduction of the lane-partials in JAX.
    return jnp.sum(out, axis=(0, 2))


class CenterNetCriterion:
    """JAX/Pallas port of the PyTorch CenterNetCriterion (no learnable params)."""

    def __init__(self, num_classes=1, mask_loss_weight=1.0,
                 regr_loss_weight=1.0, size_average=True, tile=None):
        self.num_classes = num_classes
        self.mask_loss_weight = mask_loss_weight
        self.regr_loss_weight = regr_loss_weight
        self.size_average = size_average
        self.tile = tile          # optional spatial tile override (testing/tuning)

    def __call__(self, predicted_heatmap, predicted_regr,
                 target_heatmap, target_regr):
        sums = _centernet_sums(predicted_heatmap, predicted_regr,
                               target_heatmap, target_regr, tile=self.tile)
        num_pos, pos_sum, neg_sum, th_sum, regr_num = (
            sums[0], sums[1], sums[2], sums[3], sums[4])

        safe_den = jnp.where(num_pos == 0.0, 1.0, num_pos)
        mask_loss = jnp.where(num_pos == 0.0,
                              -neg_sum,
                              -(pos_sum + neg_sum) / safe_den)
        mask_loss = mask_loss * self.mask_loss_weight

        # NOTE: matches the reference -- NaN if target_heatmap.sum() == 0.
        regr_loss = (regr_num / th_sum) * self.regr_loss_weight

        loss = mask_loss + regr_loss
        if not self.size_average:
            loss = loss * predicted_heatmap.shape[0]
        return loss, mask_loss, regr_loss


# ---------------------------------------------------------------------------
# Pure-JAX reference (mirrors the PyTorch code line-for-line) for validation.
# ---------------------------------------------------------------------------
def _ref_neg_loss(pred, gt):
    pred = pred.astype(jnp.float32)
    gt = gt.astype(jnp.float32)
    positive_inds = (gt == 1.0).astype(jnp.float32)
    negative_inds = (gt < 1.0).astype(jnp.float32)
    negative_weights = (1.0 - gt) ** 4
    positive_loss = jnp.log(pred + 1e-12) * (1.0 - pred) ** 3 * positive_inds
    negative_loss = (jnp.log(1.0 - pred + 1e-12) * pred ** 3
                     * negative_weights * negative_inds)
    num_pos = positive_inds.sum()
    positive_loss = positive_loss.sum()
    negative_loss = negative_loss.sum()
    return jnp.where(num_pos == 0.0,
                     -negative_loss,
                     -(positive_loss + negative_loss)
                     / jnp.where(num_pos == 0.0, 1.0, num_pos))


def _ref_forward(ph, pr, th, tr, mask_w=1.0, regr_w=1.0, size_average=True):
    pred_mask = jax.nn.sigmoid(ph)
    mask_loss = _ref_neg_loss(pred_mask, th) * mask_w
    regr_loss = (jnp.abs(pr - tr).sum(1)[:, None, :, :] * th).sum() / th.sum()
    regr_loss = regr_loss * regr_w
    loss = mask_loss + regr_loss
    if not size_average:
        loss = loss * ph.shape[0]
    return loss, mask_loss, regr_loss


if __name__ == "__main__":
    def _make_inputs(key, b, c, h, w):
        k1, k2, k3, k4 = jax.random.split(key, 4)
        ph = jax.random.normal(k1, (b, c, h, w), dtype=jnp.float32)
        pr = jax.random.normal(k2, (b, 2, h, w), dtype=jnp.float32)
        u = jax.random.uniform(k3, (b, c, h, w), dtype=jnp.float32)
        th = jnp.where(u > 0.95, jnp.float32(1.0), u)   # some exact 1.0 positives
        tr = jax.random.normal(k4, (b, 2, h, w), dtype=jnp.float32)
        return ph, pr, th, tr

    root = jax.random.PRNGKey(0)
    cases = [
        # default num_classes=1: single-tile, splits=1 path, sublane fold=2
        dict(b=2, c=1, h=16, w=16, tile=None, mw=1.0, rw=1.0, avg=True),
        # C>1 channel-sum path + lane padding path, non-default weights
        dict(b=2, c=3, h=12, w=12, tile=None, mw=0.7, rw=1.3, avg=False),
        # multi-step grid per core (2 parallel x 8 arbitrary) with fold=2
        dict(b=2, c=2, h=64, w=64, tile=128, mw=1.0, rw=1.0, avg=True),
    ]

    for idx, cs in enumerate(cases):
        key = jax.random.fold_in(root, idx)
        ph, pr, th, tr = _make_inputs(key, cs["b"], cs["c"], cs["h"], cs["w"])
        crit = CenterNetCriterion(num_classes=cs["c"],
                                  mask_loss_weight=cs["mw"],
                                  regr_loss_weight=cs["rw"],
                                  size_average=cs["avg"],
                                  tile=cs["tile"])
        loss, mask_loss, regr_loss = crit(ph, pr, th, tr)
        jax.block_until_ready((loss, mask_loss, regr_loss))

        ref_loss, ref_mask, ref_regr = _ref_forward(
            ph, pr, th, tr, cs["mw"], cs["rw"], cs["avg"])

        for got, want, name in ((loss, ref_loss, "loss"),
                                (mask_loss, ref_mask, "mask_loss"),
                                (regr_loss, ref_regr, "regr_loss")):
            assert jnp.allclose(got, want, rtol=5e-3, atol=5e-4), (
                idx, name, float(got), float(want))

    print("KERNEL_OK")
</pallas_src>

<mosaic_0001>
module attributes {stable_mosaic.version = 11 : i64} {
  func.func @kernel(%arg0: i32, %arg1: i32, %arg2: memref<4x128xf32, #tpu.memory_space<vmem>>, %arg3: memref<8x128xf32, #tpu.memory_space<vmem>>, %arg4: memref<4x128xf32, #tpu.memory_space<vmem>>, %arg5: memref<8x128xf32, #tpu.memory_space<vmem>>, %arg6: memref<1x5x128xf32, #tpu.memory_space<vmem>>, %arg7: memref<4x128xf32, #tpu.memory_space<vmem>>, %arg8: memref<4x128xf32, #tpu.memory_space<vmem>>, %arg9: memref<4x128xf32, #tpu.memory_space<vmem>>, %arg10: memref<4x128xf32, #tpu.memory_space<vmem>>, %arg11: memref<2x128xf32, #tpu.memory_space<vmem>>) attributes {dimension_semantics = [#tpu.dimension_semantics<parallel>, #tpu.dimension_semantics<arbitrary>], iteration_bounds = array<i64: 1, 1>, scalar_prefetch = 0 : i64, scratch_operands = 5 : i64, tpu.core_type = #tpu.core_type<tc>, window_params = [{transform_indices = @transform_0, window_bounds = array<i64: 4, 128>}, {transform_indices = @transform_1, window_bounds = array<i64: 8, 128>}, {transform_indices = @transform_2, window_bounds = array<i64: 4, 128>}, {transform_indices = @transform_3, window_bounds = array<i64: 8, 128>}, {transform_indices = @transform_4, window_bounds = array<i64: 1, 5, 128>}]} {
    %c0_i32 = arith.constant 0 : i32
    %0 = arith.cmpi eq, %arg1, %c0_i32 : i32
    %1 = arith.extui %0 : i1 to i32
    %c0_i32_0 = arith.constant 0 : i32
    %2 = arith.cmpi ne, %1, %c0_i32_0 : i32
    scf.if %2 {
      %cst_46 = arith.constant 0.000000e+00 : f32
      %90 = vector.broadcast %cst_46 : f32 to vector<4x128xf32>
      %c0_47 = arith.constant 0 : index
      %c0_48 = arith.constant 0 : index
      %91 = vector.load %arg7[%c0_47, %c0_48] : memref<4x128xf32, #tpu.memory_space<vmem>>, vector<4x128xf32>
      tpu.vector_store %arg7[%c0_47, %c0_48], %90 {strides = array<i32>} : memref<4x128xf32, #tpu.memory_space<vmem>>, vector<4x128xf32>,
      %cst_49 = arith.constant 0.000000e+00 : f32
      %92 = vector.broadcast %cst_49 : f32 to vector<4x128xf32>
      %c0_50 = arith.constant 0 : index
      %c0_51 = arith.constant 0 : index
      %93 = vector.load %arg8[%c0_50, %c0_51] : memref<4x128xf32, #tpu.memory_space<vmem>>, vector<4x128xf32>
      tpu.vector_store %arg8[%c0_50, %c0_51], %92 {strides = array<i32>} : memref<4x128xf32, #tpu.memory_space<vmem>>, vector<4x128xf32>,
      %cst_52 = arith.constant 0.000000e+00 : f32
      %94 = vector.broadcast %cst_52 : f32 to vector<4x128xf32>
      %c0_53 = arith.constant 0 : index
      %c0_54 = arith.constant 0 : index
      %95 = vector.load %arg9[%c0_53, %c0_54] : memref<4x128xf32, #tpu.memory_space<vmem>>, vector<4x128xf32>
      tpu.vector_store %arg9[%c0_53, %c0_54], %94 {strides = array<i32>} : memref<4x128xf32, #tpu.memory_space<vmem>>, vector<4x128xf32>,
      %cst_55 = arith.constant 0.000000e+00 : f32
      %96 = vector.broadcast %cst_55 : f32 to vector<4x128xf32>
      %c0_56 = arith.constant 0 : index
      %c0_57 = arith.constant 0 : index
      %97 = vector.load %arg10[%c0_56, %c0_57] : memref<4x128xf32, #tpu.memory_space<vmem>>, vector<4x128xf32>
      tpu.vector_store %arg10[%c0_56, %c0_57], %96 {strides = array<i32>} : memref<4x128xf32, #tpu.memory_space<vmem>>, vector<4x128xf32>,
      %cst_58 = arith.constant 0.000000e+00 : f32
      %98 = vector.broadcast %cst_58 : f32 to vector<2x128xf32>
      %c0_59 = arith.constant 0 : index
      %c0_60 = arith.constant 0 : index
      %99 = vector.load %arg11[%c0_59, %c0_60] : memref<2x128xf32, #tpu.memory_space<vmem>>, vector<2x128xf32>
      tpu.vector_store %arg11[%c0_59, %c0_60], %98 {strides = array<i32>} : memref<2x128xf32, #tpu.memory_space<vmem>>, vector<2x128xf32>,
    } else {
    }
    %c0 = arith.constant 0 : index
    %c0_1 = arith.constant 0 : index
    %3 = vector.load %arg2[%c0, %c0_1] : memref<4x128xf32, #tpu.memory_space<vmem>>, vector<4x128xf32>
    %c0_2 = arith.constant 0 : index
    %c0_3 = arith.constant 0 : index
    %4 = vector.load %arg4[%c0_2, %c0_3] : memref<4x128xf32, #tpu.memory_space<vmem>>, vector<4x128xf32>
    %c0_4 = arith.constant 0 : index
    %c0_5 = arith.constant 0 : index
    %5 = vector.load %arg3[%c0_4, %c0_5] : memref<8x128xf32, #tpu.memory_space<vmem>>, vector<8x128xf32>
    %c0_6 = arith.constant 0 : index
    %c0_7 = arith.constant 0 : index
    %6 = vector.load %arg5[%c0_6, %c0_7] : memref<8x128xf32, #tpu.memory_space<vmem>>, vector<8x128xf32>
    %7 = arith.subf %5, %6 : vector<8x128xf32>
    %8 = math.absf %7 : vector<8x128xf32>
    %9 = math.absf %3 : vector<4x128xf32>
    %cst = arith.constant 0.000000e+00 : f32
    %10 = vector.broadcast %cst : f32 to vector<4x128xf32>
    %11 = arith.subf %10, %9 : vector<4x128xf32>
    %12 = math.exp %11 : vector<4x128xf32>
    %cst_8 = arith.constant 1.000000e+00 : f32
    %13 = vector.broadcast %cst_8 : f32 to vector<4x128xf32>
    %14 = arith.addf %13, %12 : vector<4x128xf32>
    %15 = math.log %14 : vector<4x128xf32>
    %cst_9 = arith.constant 0.000000e+00 : f32
    %16 = vector.broadcast %cst_9 : f32 to vector<4x128xf32>
    %17 = arith.subf %16, %3 : vector<4x128xf32>
    %cst_10 = arith.constant 0.000000e+00 : f32
    %18 = vector.broadcast %cst_10 : f32 to vector<4x128xf32>
    %19 = arith.maximumf %17, %18 : vector<4x128xf32>
    %20 = arith.addf %19, %15 : vector<4x128xf32>
    %cst_11 = arith.constant 0.000000e+00 : f32
    %21 = vector.broadcast %cst_11 : f32 to vector<4x128xf32>
    %22 = arith.subf %21, %20 : vector<4x128xf32>
    %cst_12 = arith.constant 0.000000e+00 : f32
    %23 = vector.broadcast %cst_12 : f32 to vector<4x128xf32>
    %24 = arith.maximumf %3, %23 : vector<4x128xf32>
    %25 = arith.addf %24, %15 : vector<4x128xf32>
    %cst_13 = arith.constant 0.000000e+00 : f32
    %26 = vector.broadcast %cst_13 : f32 to vector<4x128xf32>
    %27 = arith.subf %26, %25 : vector<4x128xf32>
    %cst_14 = arith.constant 1.000000e+00 : f32
    %28 = vector.broadcast %cst_14 : f32 to vector<4x128xf32>
    %29 = arith.addf %28, %12 : vector<4x128xf32>
    %30 = tpu.reciprocal %29 {approx = true} : vector<4x128xf32> -> vector<4x128xf32>
    %31 = arith.mulf %29, %30 : vector<4x128xf32>
    %cst_15 = arith.constant 2.000000e+00 : f32
    %32 = vector.broadcast %cst_15 : f32 to vector<4x128xf32>
    %33 = arith.subf %32, %31 : vector<4x128xf32>
    %34 = arith.mulf %30, %33 : vector<4x128xf32>
    %35 = arith.mulf %12, %34 : vector<4x128xf32>
    %cst_16 = arith.constant 0.000000e+00 : f32
    %36 = vector.broadcast %cst_16 : f32 to vector<4x128xf32>
    %37 = arith.cmpf oge, %3, %36 : vector<4x128xf32>
    %38 = arith.select %37, %34, %35 : vector<4x128xi1>, vector<4x128xf32>
    %39 = arith.select %37, %35, %34 : vector<4x128xi1>, vector<4x128xf32>
    %cst_17 = arith.constant 1.000000e+00 : f32
    %40 = vector.broadcast %cst_17 : f32 to vector<4x128xf32>
    %41 = arith.cmpf oeq, %4, %40 : vector<4x128xf32>
    %42 = arith.extui %41 : vector<4x128xi1> to vector<4x128xi32>
    %43 = arith.sitofp %42 : vector<4x128xi32> to vector<4x128xf32>
    %cst_18 = arith.constant 1.000000e+00 : f32
    %44 = vector.broadcast %cst_18 : f32 to vector<4x128xf32>
    %45 = arith.subf %44, %43 : vector<4x128xf32>
    %cst_19 = arith.constant 1.000000e+00 : f32
    %46 = vector.broadcast %cst_19 : f32 to vector<4x128xf32>
    %47 = arith.subf %46, %4 : vector<4x128xf32>
    %48 = arith.mulf %47, %47 : vector<4x128xf32>
    %49 = arith.mulf %48, %48 : vector<4x128xf32>
    %50 = arith.mulf %38, %38 : vector<4x128xf32>
    %51 = arith.mulf %50, %38 : vector<4x128xf32>
    %52 = arith.mulf %39, %39 : vector<4x128xf32>
    %53 = arith.mulf %52, %39 : vector<4x128xf32>
    %54 = arith.mulf %22, %53 : vector<4x128xf32>
    %55 = arith.mulf %54, %43 : vector<4x128xf32>
    %56 = arith.mulf %27, %51 : vector<4x128xf32>
    %57 = arith.mulf %56, %49 : vector<4x128xf32>
    %58 = arith.mulf %57, %45 : vector<4x128xf32>
    %c0_20 = arith.constant 0 : index
    %c0_21 = arith.constant 0 : index
    %59 = vector.load %arg7[%c0_20, %c0_21] : memref<4x128xf32, #tpu.memory_space<vmem>>, vector<4x128xf32>
    %60 = arith.addf %59, %43 : vector<4x128xf32>
    %c0_22 = arith.constant 0 : index
    %c0_23 = arith.constant 0 : index
    %61 = vector.load %arg7[%c0_22, %c0_23] : memref<4x128xf32, #tpu.memory_space<vmem>>, vector<4x128xf32>
    tpu.vector_store %arg7[%c0_22, %c0_23], %60 {strides = array<i32>} : memref<4x128xf32, #tpu.memory_space<vmem>>, vector<4x128xf32>,
    %c0_24 = arith.constant 0 : index
    %c0_25 = arith.constant 0 : index
    %62 = vector.load %arg8[%c0_24, %c0_25] : memref<4x128xf32, #tpu.memory_space<vmem>>, vector<4x128xf32>
    %63 = arith.addf %62, %55 : vector<4x128xf32>
    %c0_26 = arith.constant 0 : index
    %c0_27 = arith.constant 0 : index
    %64 = vector.load %arg8[%c0_26, %c0_27] : memref<4x128xf32, #tpu.memory_space<vmem>>, vector<4x128xf32>
    tpu.vector_store %arg8[%c0_26, %c0_27], %63 {strides = array<i32>} : memref<4x128xf32, #tpu.memory_space<vmem>>, vector<4x128xf32>,
    %c0_28 = arith.constant 0 : index
    %c0_29 = arith.constant 0 : index
    %65 = vector.load %arg9[%c0_28, %c0_29] : memref<4x128xf32, #tpu.memory_space<vmem>>, vector<4x128xf32>
    %66 = arith.addf %65, %58 : vector<4x128xf32>
    %c0_30 = arith.constant 0 : index
    %c0_31 = arith.constant 0 : index
    %67 = vector.load %arg9[%c0_30, %c0_31] : memref<4x128xf32, #tpu.memory_space<vmem>>, vector<4x128xf32>
    tpu.vector_store %arg9[%c0_30, %c0_31], %66 {strides = array<i32>} : memref<4x128xf32, #tpu.memory_space<vmem>>, vector<4x128xf32>,
    %c0_32 = arith.constant 0 : index
    %c0_33 = arith.constant 0 : index
    %68 = vector.load %arg10[%c0_32, %c0_33] : memref<4x128xf32, #tpu.memory_space<vmem>>, vector<4x128xf32>
    %69 = arith.addf %68, %4 : vector<4x128xf32>
    %c0_34 = arith.constant 0 : index
    %c0_35 = arith.constant 0 : index
    %70 = vector.load %arg10[%c0_34, %c0_35] : memref<4x128xf32, #tpu.memory_space<vmem>>, vector<4x128xf32>
    tpu.vector_store %arg10[%c0_34, %c0_35], %69 {strides = array<i32>} : memref<4x128xf32, #tpu.memory_space<vmem>>, vector<4x128xf32>,
    %71 = vector.extract_strided_slice %4 {offsets = [0, 0], sizes = [2, 128], strides = [1, 1]} : vector<4x128xf32> to vector<2x128xf32>
    %72 = vector.extract_strided_slice %8 {offsets = [0, 0], sizes = [2, 128], strides = [1, 1]} : vector<8x128xf32> to vector<2x128xf32>
    %73 = vector.extract_strided_slice %8 {offsets = [2, 0], sizes = [2, 128], strides = [1, 1]} : vector<8x128xf32> to vector<2x128xf32>
    %74 = arith.addf %72, %73 : vector<2x128xf32>
    %c0_36 = arith.constant 0 : index
    %c0_37 = arith.constant 0 : index
    %75 = vector.load %arg11[%c0_36, %c0_37] : memref<2x128xf32, #tpu.memory_space<vmem>>, vector<2x128xf32>
    %76 = arith.mulf %71, %74 : vector<2x128xf32>
    %77 = arith.addf %75, %76 : vector<2x128xf32>
    %c0_38 = arith.constant 0 : index
    %c0_39 = arith.constant 0 : index
    %78 = vector.load %arg11[%c0_38, %c0_39] : memref<2x128xf32, #tpu.memory_space<vmem>>, vector<2x128xf32>
    tpu.vector_store %arg11[%c0_38, %c0_39], %77 {strides = array<i32>} : memref<2x128xf32, #tpu.memory_space<vmem>>, vector<2x128xf32>,
    %79 = vector.extract_strided_slice %4 {offsets = [2, 0], sizes = [2, 128], strides = [1, 1]} : vector<4x128xf32> to vector<2x128xf32>
    %80 = vector.extract_strided_slice %8 {offsets = [4, 0], sizes = [2, 128], strides = [1, 1]} : vector<8x128xf32> to vector<2x128xf32>
    %81 = vector.extract_strided_slice %8 {offsets = [6, 0], sizes = [2, 128], strides = [1, 1]} : vector<8x128xf32> to vector<2x128xf32>
    %82 = arith.addf %80, %81 : vector<2x128xf32>
    %c0_40 = arith.constant 0 : index
    %c0_41 = arith.constant 0 : index
    %83 = vector.load %arg11[%c0_40, %c0_41] : memref<2x128xf32, #tpu.memory_space<vmem>>, vector<2x128xf32>
    %84 = arith.mulf %79, %82 : vector<2x128xf32>
    %85 = arith.addf %83, %84 : vector<2x128xf32>
    %c0_42 = arith.constant 0 : index
    %c0_43 = arith.constant 0 : index
    %86 = vector.load %arg11[%c0_42, %c0_43] : memref<2x128xf32, #tpu.memory_space<vmem>>, vector<2x128xf32>
    tpu.vector_store %arg11[%c0_42, %c0_43], %85 {strides = array<i32>} : memref<2x128xf32, #tpu.memory_space<vmem>>, vector<2x128xf32>,
    %c0_i32_44 = arith.constant 0 : i32
    %87 = arith.cmpi eq, %arg1, %c0_i32_44 : i32
    %88 = arith.extui %87 : i1 to i32
    %c0_i32_45 = arith.constant 0 : i32
    %89 = arith.cmpi ne, %88, %c0_i32_45 : i32
    scf.if %89 {
      %c0_46 = arith.constant 0 : index
      %c0_47 = arith.constant 0 : index
      %90 = vector.load %arg7[%c0_46, %c0_47] : memref<4x128xf32, #tpu.memory_space<vmem>>, vector<4x128xf32>
      %cst_48 = arith.constant dense<0.000000e+00> : vector<128xf32>
      %91 = vector.multi_reduction <add>, %90, %cst_48 [0] : vector<4x128xf32> to vector<128xf32>
      %92 = vector.shape_cast %91 : vector<128xf32> to vector<1x128xf32>
      %c0_49 = arith.constant 0 : index
      %c0_50 = arith.constant 0 : index
      %c0_51 = arith.constant 0 : index
      %93 = vector.load %arg6[%c0_49, %c0_50, %c0_51] : memref<1x5x128xf32, #tpu.memory_space<vmem>>, vector<1x1x128xf32>
      %94 = vector.shape_cast %93 : vector<1x1x128xf32> to vector<1x128xf32>
      %95 = vector.shape_cast %92 : vector<1x128xf32> to vector<1x1x128xf32>
      tpu.vector_store %arg6[%c0_49, %c0_50, %c0_51], %95 {strides = array<i32>} : memref<1x5x128xf32, #tpu.memory_space<vmem>>, vector<1x1x128xf32>,
      %c0_52 = arith.constant 0 : index
      %c0_53 = arith.constant 0 : index
      %96 = vector.load %arg8[%c0_52, %c0_53] : memref<4x128xf32, #tpu.memory_space<vmem>>, vector<4x128xf32>
      %cst_54 = arith.constant dense<0.000000e+00> : vector<128xf32>
      %97 = vector.multi_reduction <add>, %96, %cst_54 [0] : vector<4x128xf32> to vector<128xf32>
      %98 = vector.shape_cast %97 : vector<128xf32> to vector<1x128xf32>
      %c0_55 = arith.constant 0 : index
      %c1 = arith.constant 1 : index
      %c0_56 = arith.constant 0 : index
      %99 = vector.load %arg6[%c0_55, %c1, %c0_56] : memref<1x5x128xf32, #tpu.memory_space<vmem>>, vector<1x1x128xf32>
      %100 = vector.shape_cast %99 : vector<1x1x128xf32> to vector<1x128xf32>
      %101 = vector.shape_cast %98 : vector<1x128xf32> to vector<1x1x128xf32>
      tpu.vector_store %arg6[%c0_55, %c1, %c0_56], %101 {strides = array<i32>} : memref<1x5x128xf32, #tpu.memory_space<vmem>>, vector<1x1x128xf32>,
      %c0_57 = arith.constant 0 : index
      %c0_58 = arith.constant 0 : index
      %102 = vector.load %arg9[%c0_57, %c0_58] : memref<4x128xf32, #tpu.memory_space<vmem>>, vector<4x128xf32>
      %cst_59 = arith.constant dense<0.000000e+00> : vector<128xf32>
      %103 = vector.multi_reduction <add>, %102, %cst_59 [0] : vector<4x128xf32> to vector<128xf32>
      %104 = vector.shape_cast %103 : vector<128xf32> to vector<1x128xf32>
      %c0_60 = arith.constant 0 : index
      %c2 = arith.constant 2 : index
      %c0_61 = arith.constant 0 : index
      %105 = vector.load %arg6[%c0_60, %c2, %c0_61] : memref<1x5x128xf32, #tpu.memory_space<vmem>>, vector<1x1x128xf32>
      %106 = vector.shape_cast %105 : vector<1x1x128xf32> to vector<1x128xf32>
      %107 = vector.shape_cast %104 : vector<1x128xf32> to vector<1x1x128xf32>
      tpu.vector_store %arg6[%c0_60, %c2, %c0_61], %107 {strides = array<i32>} : memref<1x5x128xf32, #tpu.memory_space<vmem>>, vector<1x1x128xf32>,
      %c0_62 = arith.constant 0 : index
      %c0_63 = arith.constant 0 : index
      %108 = vector.load %arg10[%c0_62, %c0_63] : memref<4x128xf32, #tpu.memory_space<vmem>>, vector<4x128xf32>
      %cst_64 = arith.constant dense<0.000000e+00> : vector<128xf32>
      %109 = vector.multi_reduction <add>, %108, %cst_64 [0] : vector<4x128xf32> to vector<128xf32>
      %110 = vector.shape_cast %109 : vector<128xf32> to vector<1x128xf32>
      %c0_65 = arith.constant 0 : index
      %c3 = arith.constant 3 : index
      %c0_66 = arith.constant 0 : index
      %111 = vector.load %arg6[%c0_65, %c3, %c0_66] : memref<1x5x128xf32, #tpu.memory_space<vmem>>, vector<1x1x128xf32>
      %112 = vector.shape_cast %111 : vector<1x1x128xf32> to vector<1x128xf32>
      %113 = vector.shape_cast %110 : vector<1x128xf32> to vector<1x1x128xf32>
      tpu.vector_store %arg6[%c0_65, %c3, %c0_66], %113 {strides = array<i32>} : memref<1x5x128xf32, #tpu.memory_space<vmem>>, vector<1x1x128xf32>,
      %c0_67 = arith.constant 0 : index
      %c0_68 = arith.constant 0 : index
      %114 = vector.load %arg11[%c0_67, %c0_68] : memref<2x128xf32, #tpu.memory_space<vmem>>, vector<2x128xf32>
      %cst_69 = arith.constant dense<0.000000e+00> : vector<128xf32>
      %115 = vector.multi_reduction <add>, %114, %cst_69 [0] : vector<2x128xf32> to vector<128xf32>
      %116 = vector.shape_cast %115 : vector<128xf32> to vector<1x128xf32>
      %c0_70 = arith.constant 0 : index
      %c4 = arith.constant 4 : index
      %c0_71 = arith.constant 0 : index
      %117 = vector.load %arg6[%c0_70, %c4, %c0_71] : memref<1x5x128xf32, #tpu.memory_space<vmem>>, vector<1x1x128xf32>
      %118 = vector.shape_cast %117 : vector<1x1x128xf32> to vector<1x128xf32>
      %119 = vector.shape_cast %116 : vector<1x128xf32> to vector<1x1x128xf32>
      tpu.vector_store %arg6[%c0_70, %c4, %c0_71], %119 {strides = array<i32>} : memref<1x5x128xf32, #tpu.memory_space<vmem>>, vector<1x1x128xf32>,
    } else {
    }
    return
  }
  func.func @transform_0(%arg0: i32, %arg1: i32) -> (i32, i32) {
    %c1_i32 = arith.constant 1 : i32
    %0 = arith.muli %arg0, %c1_i32 : i32
    %1 = arith.addi %0, %arg1 : i32
    %c0_i32 = arith.constant 0 : i32
    %c0_i32_0 = arith.constant 0 : i32
    return %c0_i32, %1 : i32, i32
  }
  func.func @transform_1(%arg0: i32, %arg1: i32) -> (i32, i32) {
    %c1_i32 = arith.constant 1 : i32
    %0 = arith.muli %arg0, %c1_i32 : i32
    %1 = arith.addi %0, %arg1 : i32
    %c0_i32 = arith.constant 0 : i32
    %c0_i32_0 = arith.constant 0 : i32
    return %c0_i32, %1 : i32, i32
  }
  func.func @transform_2(%arg0: i32, %arg1: i32) -> (i32, i32) {
    %c1_i32 = arith.constant 1 : i32
    %0 = arith.muli %arg0, %c1_i32 : i32
    %1 = arith.addi %0, %arg1 : i32
    %c0_i32 = arith.constant 0 : i32
    %c0_i32_0 = arith.constant 0 : i32
    return %c0_i32, %1 : i32, i32
  }
  func.func @transform_3(%arg0: i32, %arg1: i32) -> (i32, i32) {
    %c1_i32 = arith.constant 1 : i32
    %0 = arith.muli %arg0, %c1_i32 : i32
    %1 = arith.addi %0, %arg1 : i32
    %c0_i32 = arith.constant 0 : i32
    %c0_i32_0 = arith.constant 0 : i32
    return %c0_i32, %1 : i32, i32
  }
  func.func @transform_4(%arg0: i32, %arg1: i32) -> (i32, i32, i32) {
    %c0_i32 = arith.constant 0 : i32
    %c0_i32_0 = arith.constant 0 : i32
    %c0_i32_1 = arith.constant 0 : i32
    return %arg0, %c0_i32, %c0_i32_0 : i32, i32, i32
  }
}

</mosaic_0001>

<llo_original>
// kernel: tpu_custom_call.1
$region0: #{tpu_custom_call.1}
  #allocation0 [shape = 'u32[]', space=smem, size = 0x4, offset = 0x4, fixed_abs, tag = 'smem constant byte address 0x4 - core index']
  #allocation1 [shape = 'u32[72,128]{1,0:T(1,128)}', space=vmem, size = 0x9000, scoped, tag = 'internal scratch']
  #allocation2 [shape = 'f32[4,128]{1,0:T(4,128)}', space=vmem, size = 0x800, scoped, tag = 'scratch operand']
  #allocation3 [shape = 'f32[4,128]{1,0:T(4,128)}', space=vmem, size = 0x800, scoped, tag = 'scratch operand']
  #allocation4 [shape = 'f32[4,128]{1,0:T(4,128)}', space=vmem, size = 0x800, scoped, tag = 'scratch operand']
  #allocation5 [shape = 'f32[4,128]{1,0:T(4,128)}', space=vmem, size = 0x800, scoped, tag = 'scratch operand']
  #allocation6 [shape = 'f32[2,128]{1,0:T(2,128)}', space=vmem, size = 0x400, scoped, tag = 'scratch operand']
  %s0 = inlined_call_operand.hbm [shape: f32[4,128], index: 0, kind: input, shape index: {}]
  %s1 = inlined_call_operand.hbm [shape: f32[8,128], index: 1, kind: input, shape index: {}]
  %s2 = inlined_call_operand.hbm [shape: f32[4,128], index: 2, kind: input, shape index: {}]
  %s3 = inlined_call_operand.hbm [shape: f32[8,128], index: 3, kind: input, shape index: {}]
  %s4 = inlined_call_operand.vmem [shape: f32[1,5,128], index: 4, kind: output, shape index: {}]
  %s5 = sld [smem:[#allocation0]]
  $region50: #{tpu_custom_call.1} parent=0
    _
  %s7 = ssub.s32 1, %s5
  %s8 = scalar_select 0, %s7, %s5
  $region1: #{tpu_custom_call.1} parent=0
    #allocation7 [shape = 'u8[2048]{0}', space=vmem, size = 0x800, scoped, tag = 'input window, operand 0, single buffered']
    #allocation8 [shape = 's32[1]{0}', space=sflag, size = 0x4, scoped, tag = 'scoped memory for tpu_custom_call.1']
    #allocation9 [shape = 'u8[4096]{0}', space=vmem, size = 0x1000, scoped, tag = 'input window, operand 1, single buffered']
    #allocation10 [shape = 's32[1]{0}', space=sflag, size = 0x4, scoped, tag = 'scoped memory for tpu_custom_call.1']
    #allocation11 [shape = 'u8[2048]{0}', space=vmem, size = 0x800, scoped, tag = 'input window, operand 2, single buffered']
    #allocation12 [shape = 'u8[4096]{0}', space=vmem, size = 0x1000, scoped, tag = 'input window, operand 3, single buffered']
    #allocation13 [shape = 's32[1]{0}', space=sflag, size = 0x4, scoped, tag = 'scoped memory for tpu_custom_call.1']
    %9 = vsyncpa [#allocation8], 0
    %10 = vsyncpa [#allocation10], 0
    %11 = vsyncpa [#allocation13], 0
    // Predicated region
    $region2: #{tpu_custom_call.1} parent=1 // pred_check
      _
    $region3: #{tpu_custom_call.1} parent=1 // pred_check_branch
      %13 = sbr.rel (0) target = $region5
    $region4: #{tpu_custom_call.1} parent=1 // pred_region
      %s14 = sadd.s32 0, 0
      %16 = vsyncadd [#allocation8], 0
      %s17 = smul.addr %s14, 4
      %s18 = scalar_lea.hbm %s0, %s17
      %s20 = sshll.u32 %s18, 4
      %s21 = int_to_ptr.hbm [resolvable:$true] %s20
      %s22 = sshll.u32 [#allocation7], 4
      %s23 = int_to_ptr.vmem [resolvable:$true] %s22
      %25 = dma.hbm_to_vmem [thread:$0]  %s21, 64, %s23, [#allocation8]
    $region5: #{tpu_custom_call.1} parent=1 // pred_fallthru
      _
    // Predicated region
    $region6: #{tpu_custom_call.1} parent=1 // pred_check
      _
    $region7: #{tpu_custom_call.1} parent=1 // pred_check_branch
      %27 = sbr.rel (0) target = $region9
    $region8: #{tpu_custom_call.1} parent=1 // pred_region
      %s28 = sadd.s32 0, 0
      %30 = vsyncadd [#allocation10], 0
      %s31 = smul.addr %s28, 8
      %s32 = scalar_lea.hbm %s1, %s31
      %s34 = sshll.u32 %s32, 4
      %s35 = int_to_ptr.hbm [resolvable:$true] %s34
      %s36 = sshll.u32 [#allocation9], 4
      %s37 = int_to_ptr.vmem [resolvable:$true] %s36
      %39 = dma.hbm_to_vmem [thread:$0]  %s35, 128, %s37, [#allocation10]
    $region9: #{tpu_custom_call.1} parent=1 // pred_fallthru
      _
    // Predicated region
    $region10: #{tpu_custom_call.1} parent=1 // pred_check
      _
    $region11: #{tpu_custom_call.1} parent=1 // pred_check_branch
      %41 = sbr.rel (0) target = $region13
    $region12: #{tpu_custom_call.1} parent=1 // pred_region
      %s42 = sadd.s32 0, 0
      %44 = vsyncadd [#allocation10], 0
      %s45 = smul.addr %s42, 4
      %s46 = scalar_lea.hbm %s2, %s45
      %s48 = sshll.u32 %s46, 4
      %s49 = int_to_ptr.hbm [resolvable:$true] %s48
      %s50 = sshll.u32 [#allocation11], 4
      %s51 = int_to_ptr.vmem [resolvable:$true] %s50
      %53 = dma.hbm_to_vmem [thread:$0]  %s49, 64, %s51, [#allocation10]
    $region13: #{tpu_custom_call.1} parent=1 // pred_fallthru
      _
    // Predicated region
    $region14: #{tpu_custom_call.1} parent=1 // pred_check
      _
    $region15: #{tpu_custom_call.1} parent=1 // pred_check_branch
      %55 = sbr.rel (0) target = $region17
    $region16: #{tpu_custom_call.1} parent=1 // pred_region
      %s56 = sadd.s32 0, 0
      %58 = vsyncadd [#allocation13], 0
      %s59 = smul.addr %s56, 8
      %s60 = scalar_lea.hbm %s3, %s59
      %s62 = sshll.u32 %s60, 4
      %s63 = int_to_ptr.hbm [resolvable:$true] %s62
      %s64 = sshll.u32 [#allocation12], 4
      %s65 = int_to_ptr.vmem [resolvable:$true] %s64
      %67 = dma.hbm_to_vmem [thread:$0]  %s63, 128, %s65, [#allocation13]
    $region17: #{tpu_custom_call.1} parent=1 // pred_fallthru
      _
    // Predicated region
    $region18: #{tpu_custom_call.1} parent=1 // pred_check
      _
    $region19: #{tpu_custom_call.1} parent=1 // pred_check_branch
      %69 = sbr.rel (0) target = $region21
    $region20: #{tpu_custom_call.1} parent=1 // pred_region
      %71 = dma.done [#allocation8], 64
    $region21: #{tpu_custom_call.1} parent=1 // pred_fallthru
      _
    // Predicated region
    $region22: #{tpu_custom_call.1} parent=1 // pred_check
      _
    $region23: #{tpu_custom_call.1} parent=1 // pred_check_branch
      %73 = sbr.rel (0) target = $region25
    $region24: #{tpu_custom_call.1} parent=1 // pred_region
      %75 = dma.done [#allocation10], 128
    $region25: #{tpu_custom_call.1} parent=1 // pred_fallthru
      _
    // Predicated region
    $region26: #{tpu_custom_call.1} parent=1 // pred_check
      _
    $region27: #{tpu_custom_call.1} parent=1 // pred_check_branch
      %77 = sbr.rel (0) target = $region29
    $region28: #{tpu_custom_call.1} parent=1 // pred_region
      %79 = dma.done [#allocation10], 64
    $region29: #{tpu_custom_call.1} parent=1 // pred_fallthru
      _
    // Predicated region
    $region30: #{tpu_custom_call.1} parent=1 // pred_check
      _
    $region31: #{tpu_custom_call.1} parent=1 // pred_check_branch
      %81 = sbr.rel (0) target = $region33
    $region32: #{tpu_custom_call.1} parent=1 // pred_region
      %83 = dma.done [#allocation13], 128
    $region33: #{tpu_custom_call.1} parent=1 // pred_fallthru
      _
    %s84 = sadd.s32 0, 0
    %s85 = sadd.s32 0, 0
    %s86 = sadd.s32 0, 0
    %s87 = sadd.s32 0, 0
    %p88 = scmp.eq.s32.totalorder 0, 0
    // Predicated region
    $region34: #{tpu_custom_call.1} parent=1 // pred_check
      %p89 = pneg %p88
    $region35: #{tpu_custom_call.1} parent=1 // pred_check_branch
      %91 = sbr.rel (%p89) target = $region37
    $region36: #{tpu_custom_call.1} parent=1 // pred_region
      %92 = vst [vmem:[#allocation2] sm:$0xf] 0.0
      %93 = vst [vmem:[#allocation3] sm:$0xf] 0.0
      %94 = vst [vmem:[#allocation4] sm:$0xf] 0.0
      %95 = vst [vmem:[#allocation5] sm:$0xf] 0.0
      %96 = vst [vmem:[#allocation6] sm:$0x3] 0.0
    $region37: #{tpu_custom_call.1} parent=1 // pred_fallthru
      _
    %v97 = vld [vmem:[#allocation7] sm:$0xf]
    %v98 = vld [vmem:[#allocation11] sm:$0xf]
    %v99 = vld [vmem:[#allocation9] sm:$0xff]
    %v100 = vld [vmem:[#allocation12] sm:$0xff]
    %v101 = vsub.f32 %v99, %v100
    %v102 = vand.u32 2147483647, %v101
    %v103 = vand.u32 2147483647, %v97
    %v104 = vsub.f32 0.0, %v103
    %v105 = vmul.f32 %v104, 1.442695
    %v106 = vpow.pop %v105
    %v107 = vadd.f32 %v106, 1.0
    %v108 = vlog2.pop %v107
    %v109 = vmul.f32 %v108, 0.6931472
    %v110 = vsub.f32 0.0, %v97
    %v111 = vmax.f32 %v110, 0.0
    %v112 = vadd.f32 %v111, %v109
    %v113 = vsub.f32 0.0, %v112
    %v114 = vmax.f32 %v97, 0.0
    %v115 = vadd.f32 %v114, %v109
    %v116 = vsub.f32 0.0, %v115
    %v117 = vrcp.pop %v107
    %v118 = vmul.f32 %v107, %v117
    %v119 = vsub.f32 2.0, %v118
    %v120 = vmul.f32 %v117, %v119
    %v121 = vmul.f32 %v106, %v120
    %vm122 = vcmp.ge.f32.partialorder %v97, 0.0
    %v123 = vsel %vm122, %v120, %v121
    %v124 = vsel %vm122, %v121, %v120
    %vm125 = vcmp.eq.f32.partialorder %v98, 1.0
    %v126 = vsel %vm125, 1, 0
    %v127 = vcvt.s32.f32 %v126
    %v128 = vsub.f32 1.0, %v127
    %v129 = vsub.f32 1.0, %v98
    %v130 = vmul.f32 %v129, %v129
    %v131 = vmul.f32 %v130, %v130
    %v132 = vmul.f32 %v123, %v123
    %v133 = vmul.f32 %v132, %v123
    %v134 = vmul.f32 %v124, %v124
    %v135 = vmul.f32 %v134, %v124
    %v136 = vmul.f32 %v113, %v135
    %v137 = vmul.f32 %v136, %v127
    %v138 = vmul.f32 %v116, %v133
    %v139 = vmul.f32 %v138, %v131
    %v140 = vmul.f32 %v139, %v128
    %v141 = vld [vmem:[#allocation2] sm:$0xf]
    %v142 = vadd.f32 %v141, %v127
    %143 = vst [vmem:[#allocation2] sm:$0xf] %v142
    %v144 = vld [vmem:[#allocation3] sm:$0xf]
    %v145 = vadd.f32 %v144, %v137
    %146 = vst [vmem:[#allocation3] sm:$0xf] %v145
    %v147 = vld [vmem:[#allocation4] sm:$0xf]
    %v148 = vadd.f32 %v147, %v140
    %149 = vst [vmem:[#allocation4] sm:$0xf] %v148
    %v150 = vld [vmem:[#allocation5] sm:$0xf]
    %v151 = vadd.f32 %v150, %v98
    %152 = vst [vmem:[#allocation5] sm:$0xf] %v151
    %v154 = vrot.slane %v102, 2
    %v156 = vadd.f32 %v102, %v154
    %v157 = vld [vmem:[#allocation6] sm:$0x3]
    %v158 = vmul.f32 %v98, %v156
    %v159 = vadd.f32 %v157, %v158
    %160 = vst [vmem:[#allocation6] sm:$0x3] %v159
    %v161 = vld [vmem:[#allocation6] sm:$0x3]
    %v163 = vrot.slane %v156, 2
    %v165 = vmul.f32 %v98, %v163
    %v167 = vrot.slane %v165, 2
    %v169 = vadd.f32 %v161, %v167
    %170 = vst [vmem:[#allocation6] sm:$0x3] %v169
    // Predicated region
    $region38: #{tpu_custom_call.1} parent=1 // pred_check
      %p171 = pneg %p88
    $region39: #{tpu_custom_call.1} parent=1 // pred_check_branch
      %173 = sbr.rel (%p171) target = $region41
    $region40: #{tpu_custom_call.1} parent=1 // pred_region
      %v174 = vld [vmem:[#allocation2] sm:$0xf]
      %vm175 = vcmask 1043456
      %v176 = vsel %vm175, %v174, 0.0
      %v177 = vrot.slane %v176, 4
      %v178 = vadd.f32 %v176, %v177
      %v179 = vrot.slane %v178, 2
      %v180 = vadd.f32 %v178, %v179
      %v181 = vrot.slane %v180, 1
      %v182 = vadd.f32 %v180, %v181
      %183 = vst [vmem:[%s4] sm:$0x1] %v182
      %v184 = vld [vmem:[#allocation3] sm:$0xf]
      %v185 = vsel %vm175, %v184, 0.0
      %v186 = vrot.slane %v185, 4
      %v187 = vadd.f32 %v185, %v186
      %v188 = vrot.slane %v187, 2
      %v189 = vadd.f32 %v187, %v188
      %v190 = vrot.slane %v189, 1
      %v191 = vadd.f32 %v189, %v190
      %192 = vst [vmem:[%s4 + $0x1] sm:$0x1] %v191
      %v193 = vld [vmem:[#allocation4] sm:$0xf]
      %v194 = vsel %vm175, %v193, 0.0
      %v195 = vrot.slane %v194, 4
      %v196 = vadd.f32 %v194, %v195
      %v197 = vrot.slane %v196, 2
      %v198 = vadd.f32 %v196, %v197
      %v199 = vrot.slane %v198, 1
      %v200 = vadd.f32 %v198, %v199
      %201 = vst [vmem:[%s4 + $0x2] sm:$0x1] %v200
      %v202 = vld [vmem:[#allocation5] sm:$0xf]
      %v203 = vsel %vm175, %v202, 0.0
      %v204 = vrot.slane %v203, 4
      %v205 = vadd.f32 %v203, %v204
      %v206 = vrot.slane %v205, 2
      %v207 = vadd.f32 %v205, %v206
      %v208 = vrot.slane %v207, 1
      %v209 = vadd.f32 %v207, %v208
      %210 = vst [vmem:[%s4 + $0x3] sm:$0x1] %v209
      %v211 = vld [vmem:[#allocation6] sm:$0x3]
      %vm212 = vcmask 1041408
      %v213 = vsel %vm212, %v211, 0.0
      %v214 = vrot.slane %v213, 4
      %v215 = vadd.f32 %v213, %v214
      %v216 = vrot.slane %v215, 2
      %v217 = vadd.f32 %v215, %v216
      %v218 = vrot.slane %v217, 1
      %v219 = vadd.f32 %v217, %v218
      %220 = vst [vmem:[%s4 + $0x4] sm:$0x1] %v219
    $region41: #{tpu_custom_call.1} parent=1 // pred_fallthru
      _
    // Predicated region
    $region42: #{tpu_custom_call.1} parent=1 // pred_check
      _
    $region43: #{tpu_custom_call.1} parent=1 // pred_check_branch
      %222 = sbr.rel (0) target = $region45
    $region44: #{tpu_custom_call.1} parent=1 // pred_region
      _
    $region45: #{tpu_custom_call.1} parent=1 // pred_fallthru
      _
    // Predicated region
    $region46: #{tpu_custom_call.1} parent=1 // pred_check
      _
    $region47: #{tpu_custom_call.1} parent=1 // pred_check_branch
      %224 = sbr.rel (0) target = $region49
    $region48: #{tpu_custom_call.1} parent=1 // pred_region
      _
    $region49: #{tpu_custom_call.1} parent=1 // pred_fallthru
      _
    %225 = vsyncpa [#allocation8], 1
    %226 = vsyncpa [#allocation10], 1
    %227 = vsyncpa [#allocation13], 1

</llo_original>
